<compile_context>
chip_gen: v5e
topology: v5e:2x2
jax: 0.10.0
libtpu: 0.0.40
codegen_flags: <defaults>
</compile_context>

<pallas_src>
import math

import jax
import jax.numpy as jnp
from jax.experimental import pallas as pl
from jax.experimental.pallas import tpu as pltpu

LANE = 128
ROW_MULT = 32               # node-dim padding: int8 packs (32,128), bf16 (16,128)
NEG_INF = -1e30             # finite "-inf" for padded logit columns


def _round_up(x, m):
    return ((x + m - 1) // m) * m


def _pad2d(a, rows, cols, value=0.0):
    return jnp.pad(a, ((0, rows - a.shape[0]), (0, cols - a.shape[1])),
                   constant_values=value)


def _chip_defaults():
    """(row_tile, vmem_limit) per TPU generation."""
    try:
        vmem_cap = int(pltpu.get_tpu_info().vmem_capacity_bytes)
    except Exception:
        vmem_cap = 64 * 1024 * 1024
    if vmem_cap >= 100 * 1024 * 1024:            # v5e / v6e: 128 MiB VMEM
        return 512, 64 * 1024 * 1024
    return 256, 32 * 1024 * 1024                 # v7x-class: 64 MiB VMEM


MAX_ROW_TILE, VMEM_LIMIT = _chip_defaults()

_BUFFERED_ONE = None   # lazily probed: does this JAX accept pl.Buffered(1)?


def _buffered_one_supported():
    """One-time capability probe for single-buffered (resident) BlockSpecs."""
    global _BUFFERED_ONE
    if _BUFFERED_ONE is not None:
        return _BUFFERED_ONE

    def _copy(x_ref, o_ref):
        o_ref[...] = x_ref[...]

    try:
        spec = pl.BlockSpec((8, LANE), lambda i: (0, 0),
                            pipeline_mode=pl.Buffered(1))
        out = pl.pallas_call(
            _copy,
            out_shape=jax.ShapeDtypeStruct((8, LANE), jnp.float32),
            grid=(1,),
            in_specs=[spec],
            out_specs=pl.BlockSpec((8, LANE), lambda i: (0, 0)),
        )(jnp.zeros((8, LANE), jnp.float32))
        jax.block_until_ready(out)
        _BUFFERED_ONE = True
    except Exception:
        _BUFFERED_ONE = False
    return _BUFFERED_ONE


# --------------------------------------------------------------------------
# Kernels
# --------------------------------------------------------------------------
def _sage_layer1_kernel(adj_ref, invd_ref, x_full_ref, x_self_ref,
                        w1_ref, b1_ref, h1_ref):
    """Tile of SAGEConv_1 + ELU. adj is an int8 edge-count pattern; the exact
    mean is recovered with the f32 per-row 1/deg scale."""
    adj = adj_ref[...].astype(jnp.bfloat16)
    agg = jnp.dot(adj, x_full_ref[...], preferred_element_type=jnp.float32)
    agg = agg * invd_ref[...]
    # K = 2*dp fused projection: [agg, x_self] @ [Wl; Wr]  (256-deep MXU fill)
    cat = jnp.concatenate([agg.astype(jnp.bfloat16), x_self_ref[...]], axis=-1)
    h = jnp.dot(cat, w1_ref[...], preferred_element_type=jnp.float32) + b1_ref[...]
    h = jnp.where(h > 0.0, h, jnp.exp(jnp.minimum(h, 0.0)) - 1.0)       # ELU
    h1_ref[...] = h.astype(h1_ref.dtype)


def _sage_layer2_kernel(adj_ref, invd_ref, h1_full_ref, h1_self_ref,
                        w2_ref, b2_ref, wc_ref, bc_ref, yoh_ref,
                        feat_ref, logits_ref, ploss_ref):
    """Tile of SAGEConv_2 + classify + per-tile partial cross-entropy."""
    adj = adj_ref[...].astype(jnp.bfloat16)
    agg = jnp.dot(adj, h1_full_ref[...], preferred_element_type=jnp.float32)
    agg = agg * invd_ref[...]
    cat = jnp.concatenate([agg.astype(jnp.bfloat16), h1_self_ref[...]], axis=-1)
    h2 = jnp.dot(cat, w2_ref[...], preferred_element_type=jnp.float32) + b2_ref[...]
    feat_ref[...] = h2.astype(feat_ref.dtype)                # "features"

    logits = jnp.dot(h2.astype(jnp.bfloat16), wc_ref[...],
                     preferred_element_type=jnp.float32) + bc_ref[...]
    logits_ref[...] = logits.astype(logits_ref.dtype)

    # CE partial sum: padded label cols carry a -1e30 bias (exp -> 0); one-hot
    # rows of padded tail nodes are all-zero -> excluded from the sum.
    m = jnp.max(logits, axis=-1, keepdims=True)
    lse = m + jnp.log(jnp.sum(jnp.exp(logits - m), axis=-1, keepdims=True))
    yoh = yoh_ref[...].astype(jnp.float32)
    picked = jnp.sum(logits * yoh, axis=-1, keepdims=True)
    row_w = jnp.sum(yoh, axis=-1, keepdims=True)             # 1 valid, 0 padded
    ploss_ref[0, 0] = jnp.sum(row_w * (lse - picked))


def _sage_fused_kernel(adj_ref, invd_ref, x_ref, w1_ref, b1_ref,
                       w2_ref, b2_ref, wc_ref, bc_ref, yoh_ref,
                       feat_ref, logits_ref, loss_ref):
    """Whole forward in one kernel when the padded graph fits one row tile:
    no h1 HBM round-trip, single launch / pipeline prologue."""
    adj = adj_ref[...].astype(jnp.bfloat16)
    invd = invd_ref[...]
    x = x_ref[...]

    agg1 = jnp.dot(adj, x, preferred_element_type=jnp.float32) * invd
    cat1 = jnp.concatenate([agg1.astype(jnp.bfloat16), x], axis=-1)
    h1 = jnp.dot(cat1, w1_ref[...], preferred_element_type=jnp.float32) + b1_ref[...]
    h1 = jnp.where(h1 > 0.0, h1, jnp.exp(jnp.minimum(h1, 0.0)) - 1.0)   # ELU
    h1 = h1.astype(jnp.bfloat16)

    agg2 = jnp.dot(adj, h1, preferred_element_type=jnp.float32) * invd
    cat2 = jnp.concatenate([agg2.astype(jnp.bfloat16), h1], axis=-1)
    h2 = jnp.dot(cat2, w2_ref[...], preferred_element_type=jnp.float32) + b2_ref[...]
    feat_ref[...] = h2.astype(feat_ref.dtype)

    logits = jnp.dot(h2.astype(jnp.bfloat16), wc_ref[...],
                     preferred_element_type=jnp.float32) + bc_ref[...]
    logits_ref[...] = logits.astype(logits_ref.dtype)

    m = jnp.max(logits, axis=-1, keepdims=True)
    lse = m + jnp.log(jnp.sum(jnp.exp(logits - m), axis=-1, keepdims=True))
    yoh = yoh_ref[...].astype(jnp.float32)
    picked = jnp.sum(logits * yoh, axis=-1, keepdims=True)
    row_w = jnp.sum(yoh, axis=-1, keepdims=True)
    loss_ref[0, 0] = jnp.sum(row_w * (lse - picked))


# --------------------------------------------------------------------------
# Wrapper
# --------------------------------------------------------------------------
def sage_conv_model_forward(x, edge_index, y, params, num_label, row_tile=None):
    """Returns (logits, loss, features) like SAGEConvModel.forward."""
    f32, bf16 = jnp.float32, jnp.bfloat16
    n, input_dim = x.shape
    hidden_dim = params["wl1"].shape[1]

    dp = _round_up(input_dim, LANE)
    hp = _round_up(hidden_dim, LANE)
    cp = _round_up(num_label, LANE)

    if row_tile is None:
        row_tile = MAX_ROW_TILE
    tn = min(_round_up(row_tile, ROW_MULT), _round_up(n, ROW_MULT))
    np_ = _round_up(n, tn)
    num_tiles = np_ // tn

    # ---- host-side packing: int8 adjacency counts + exact f32 1/deg --------
    # (duplicate edges keep their multiplicity, matching PyG scatter-mean;
    #  int8 is exact for < 128 parallel edges between one pair)
    src, dst = edge_index[0], edge_index[1]
    cnt = jnp.zeros((np_, np_), f32).at[dst, src].add(1.0)     # edge j -> i
    deg = jnp.sum(cnt, axis=1, keepdims=True)
    inv_deg = 1.0 / jnp.maximum(deg, 1.0)                      # (np_, 1) f32
    adj8 = cnt.astype(jnp.int8)                                # 8-bit A stream

    x_p = _pad2d(x.astype(f32), np_, dp).astype(bf16)
    # fused [Wl; Wr] so each projection is one K=2*D matmul
    w1 = jnp.concatenate([_pad2d(params["wl1"], dp, hp),
                          _pad2d(params["wr1"], dp, hp)], axis=0).astype(bf16)
    b1 = _pad2d(params["b1"], 1, hp).astype(f32)
    w2 = jnp.concatenate([_pad2d(params["wl2"], hp, hp),
                          _pad2d(params["wr2"], hp, hp)], axis=0).astype(bf16)
    b2 = _pad2d(params["b2"], 1, hp).astype(f32)
    wc = _pad2d(params["wc"], hp, cp).astype(bf16)
    bc = _pad2d(params["bc"], 1, cp, value=NEG_INF).astype(f32)
    # one-hot labels (0/1 exact in bf16) double as the valid-row mask.
    # NOTE: labels outside [0, num_label) silently drop out of the loss.
    yoh = _pad2d(jax.nn.one_hot(y, num_label, dtype=f32), np_, cp).astype(bf16)

    vmem = pltpu.MemorySpace.VMEM
    smem = pltpu.MemorySpace.SMEM

    if num_tiles == 1:
        # ---------------- fused single-call fast path -----------------------
        flops = (2 * np_ * np_ * (dp + hp) + 2 * np_ * 2 * dp * hp
                 + 2 * np_ * 2 * hp * hp + 2 * np_ * hp * cp)
        byts = (np_ * np_ + 2 * np_ * (dp + hp + cp)
                + 2 * (2 * dp * hp + 2 * hp * hp + hp * cp)
                + 4 * (np_ + 2 * hp + cp))
        feats_p, logits_p, loss_p = pl.pallas_call(
            _sage_fused_kernel,
            out_shape=(
                jax.ShapeDtypeStruct((np_, hp), bf16),     # features
                jax.ShapeDtypeStruct((np_, cp), bf16),     # logits
                jax.ShapeDtypeStruct((1, 1), f32),         # summed CE
            ),
            in_specs=[pl.BlockSpec(memory_space=vmem)] * 10,
            out_specs=(pl.BlockSpec(memory_space=vmem),
                       pl.BlockSpec(memory_space=vmem),
                       pl.BlockSpec(memory_space=smem)),
            compiler_params=pltpu.CompilerParams(vmem_limit_bytes=VMEM_LIMIT),
            cost_estimate=pl.CostEstimate(flops=flops,
                                          transcendentals=np_ * (hp + cp),
                                          bytes_accessed=byts),
        )(adj8, inv_deg, x_p, w1, b1, w2, b2, wc, bc, yoh)
        loss_sum = loss_p[0, 0]
    else:
        # ---------------- tiled two-call path (grid over node tiles) --------
        def tiled(shape):            # one block per grid step over nodes
            return pl.BlockSpec(shape, lambda i: (i, 0), memory_space=vmem)

        single = _buffered_one_supported()

        def resident(shape):         # constant-index -> single buffer suffices
            if single:
                return pl.BlockSpec(shape, lambda i: (0, 0), memory_space=vmem,
                                    pipeline_mode=pl.Buffered(1))
            return pl.BlockSpec(shape, lambda i: (0, 0), memory_space=vmem)

        cparams = pltpu.CompilerParams(dimension_semantics=("parallel",),
                                       vmem_limit_bytes=VMEM_LIMIT)

        flops1 = 2 * np_ * np_ * dp + 2 * np_ * 2 * dp * hp
        byts1 = (np_ * np_ + 2 * (2 * np_ * dp + 2 * dp * hp + np_ * hp)
                 + 4 * (np_ + hp))
        h1 = pl.pallas_call(
            _sage_layer1_kernel,
            out_shape=jax.ShapeDtypeStruct((np_, hp), bf16),
            grid_spec=pltpu.PrefetchScalarGridSpec(
                num_scalar_prefetch=0, grid=(num_tiles,),
                in_specs=[
                    tiled((tn, np_)),          # adjacency rows (int8)
                    tiled((tn, 1)),            # 1/deg for these rows
                    resident((np_, dp)),       # full x (aggregation operand)
                    tiled((tn, dp)),           # self rows of x (pipelined DMA)
                    resident((2 * dp, hp)),    # [Wl1; Wr1]
                    resident((1, hp)),         # b1
                ],
                out_specs=tiled((tn, hp)),
            ),
            compiler_params=cparams,
            cost_estimate=pl.CostEstimate(flops=flops1, transcendentals=np_ * hp,
                                          bytes_accessed=byts1),
        )(adj8, inv_deg, x_p, x_p, w1, b1)

        flops2 = 2 * np_ * np_ * hp + 2 * np_ * 2 * hp * hp + 2 * np_ * hp * cp
        byts2 = (np_ * np_ + 2 * (2 * np_ * hp + 2 * hp * hp + hp * cp
                                  + np_ * hp + 2 * np_ * cp)
                 + 4 * (np_ + hp + cp + num_tiles))
        feats_p, logits_p, ploss = pl.pallas_call(
            _sage_layer2_kernel,
            out_shape=(
                jax.ShapeDtypeStruct((np_, hp), bf16),        # features
                jax.ShapeDtypeStruct((np_, cp), bf16),        # logits
                jax.ShapeDtypeStruct((num_tiles, 1), f32),    # per-tile CE
            ),
            grid_spec=pltpu.PrefetchScalarGridSpec(
                num_scalar_prefetch=0, grid=(num_tiles,),
                in_specs=[
                    tiled((tn, np_)),          # adjacency rows (int8)
                    tiled((tn, 1)),            # 1/deg
                    resident((np_, hp)),       # full h1
                    tiled((tn, hp)),           # self rows of h1
                    resident((2 * hp, hp)),    # [Wl2; Wr2]
                    resident((1, hp)),         # b2
                    resident((hp, cp)),        # Wc
                    resident((1, cp)),         # bc (padded cols = -1e30)
                    tiled((tn, cp)),           # one-hot labels / row mask
                ],
                out_specs=(
                    tiled((tn, hp)),
                    tiled((tn, cp)),
                    pl.BlockSpec((1, 1), lambda i: (i, 0), memory_space=smem),
                ),
            ),
            compiler_params=cparams,
            cost_estimate=pl.CostEstimate(flops=flops2,
                                          transcendentals=np_ * (cp + 1),
                                          bytes_accessed=byts2),
        )(adj8, inv_deg, h1, h1, w2, b2, wc, bc, yoh)
        loss_sum = jnp.sum(ploss)

    logits = logits_p[:n, :num_label].astype(f32)
    features = feats_p[:n, :hidden_dim].astype(f32)
    loss = loss_sum / n
    return logits, loss, features


# --------------------------------------------------------------------------
# Plain-JAX reference mirroring the kernel's bf16-storage / f32-accum math
# --------------------------------------------------------------------------
def _ref_forward(x, edge_index, y, params, num_label):
    f32, bf16 = jnp.float32, jnp.bfloat16
    n = x.shape[0]
    src, dst = edge_index[0], edge_index[1]
    cnt = jnp.zeros((n, n), f32).at[dst, src].add(1.0)
    inv_deg = 1.0 / jnp.maximum(jnp.sum(cnt, axis=1, keepdims=True), 1.0)
    a = cnt.astype(bf16)
    xb = x.astype(bf16)

    def sage(h, wl, wr, b):
        agg = (jnp.dot(a, h, preferred_element_type=f32) * inv_deg).astype(bf16)
        cat = jnp.concatenate([agg, h], axis=-1)
        w = jnp.concatenate([wl, wr], axis=0).astype(bf16)
        return jnp.dot(cat, w, preferred_element_type=f32) + b

    h1 = sage(xb, params["wl1"], params["wr1"], params["b1"])
    h1 = jnp.where(h1 > 0, h1, jnp.exp(jnp.minimum(h1, 0.0)) - 1.0).astype(bf16)
    h2 = sage(h1, params["wl2"], params["wr2"], params["b2"])
    logits = jnp.dot(h2.astype(bf16), params["wc"].astype(bf16),
                     preferred_element_type=f32) + params["bc"]
    lse = jax.scipy.special.logsumexp(logits, axis=-1)
    loss = jnp.mean(lse - logits[jnp.arange(n), y])
    return logits, loss, h2


# --------------------------------------------------------------------------
# Parameter init (deterministic, mimics nn.Linear defaults; weights stored
# pre-transposed as [in, out]).  self.linear / self.dropout / self.tanh /
# self.activation exist in __init__ but are unused by forward().
# --------------------------------------------------------------------------
def init_params(key, input_dim, hidden_dim, num_label):
    ks = jax.random.split(key, 8)

    def linear_w(k, fan_in, fan_out):
        bound = math.sqrt(6.0 / ((1.0 + 5.0) * fan_in))   # kaiming_uniform a=sqrt(5)
        return jax.random.uniform(k, (fan_in, fan_out), jnp.float32, -bound, bound)

    def linear_b(k, fan_in, fan_out):
        bound = 1.0 / math.sqrt(fan_in)
        return jax.random.uniform(k, (1, fan_out), jnp.float32, -bound, bound)

    return {
        # gat1 = SAGEConv(input_dim -> hidden): lin_l (bias) + lin_r (no bias)
        "wl1": linear_w(ks[0], input_dim, hidden_dim),
        "b1":  linear_b(ks[1], input_dim, hidden_dim),
        "wr1": linear_w(ks[2], input_dim, hidden_dim),
        # gat2 = SAGEConv(hidden -> hidden)
        "wl2": linear_w(ks[3], hidden_dim, hidden_dim),
        "b2":  linear_b(ks[4], hidden_dim, hidden_dim),
        "wr2": linear_w(ks[5], hidden_dim, hidden_dim),
        # classify = nn.Linear(hidden -> num_label)
        "wc":  linear_w(ks[6], hidden_dim, num_label),
        "bc":  linear_b(ks[7], hidden_dim, num_label),
    }


if __name__ == "__main__":
    input_dim, hidden_dim, num_label = 16, 32, 6
    n_nodes, n_edges = 12, 32

    key = jax.random.PRNGKey(0)
    kx, ke1, ke2, ky, kp = jax.random.split(key, 5)

    x = jax.random.normal(kx, (n_nodes, input_dim), jnp.float32)
    src = jax.random.randint(ke1, (n_edges,), 0, n_nodes, jnp.int32)
    dst = jax.random.randint(ke2, (n_edges,), 0, n_nodes, jnp.int32)
    edge_index = jnp.stack([src, dst])                      # [2, E]
    y = jax.random.randint(ky, (n_nodes,), 0, num_label, jnp.int32)
    params = init_params(kp, input_dim, hidden_dim, num_label)

    # ---- small graph: fused single-call path ------------------------------
    logits, loss, features = sage_conv_model_forward(x, edge_index, y,
                                                     params, num_label)
    jax.block_until_ready((logits, loss, features))

    ref_logits, ref_loss, ref_feats = _ref_forward(x, edge_index, y,
                                                   params, num_label)
    assert jnp.allclose(features, ref_feats, atol=2e-2, rtol=2e-2), "features mismatch (fused)"
    assert jnp.allclose(logits, ref_logits, atol=2e-2, rtol=2e-2), "logits mismatch (fused)"
    assert jnp.allclose(loss, ref_loss, atol=1e-2, rtol=1e-2), "loss mismatch (fused)"

    # ---- larger graph, forced small row tile: tiled two-call path ---------
    n2, e2, d2, hd2 = 200, 800, 48, 64
    k2 = jax.random.split(key, 6)
    x2 = jax.random.normal(k2[0], (n2, d2), jnp.float32)
    src2 = jax.random.randint(k2[1], (e2,), 0, n2, jnp.int32)
    dst2 = jax.random.randint(k2[2], (e2,), 0, n2, jnp.int32)
    ei2 = jnp.stack([src2, dst2])
    y2 = jax.random.randint(k2[3], (n2,), 0, num_label, jnp.int32)
    params2 = init_params(k2[4], d2, hd2, num_label)

    logits2, loss2, feats2 = sage_conv_model_forward(x2, ei2, y2, params2,
                                                     num_label, row_tile=64)
    jax.block_until_ready((logits2, loss2, feats2))

    ref_logits2, ref_loss2, ref_feats2 = _ref_forward(x2, ei2, y2, params2,
                                                      num_label)
    assert jnp.allclose(feats2, ref_feats2, atol=3e-2, rtol=3e-2), "features mismatch (tiled)"
    assert jnp.allclose(logits2, ref_logits2, atol=3e-2, rtol=3e-2), "logits mismatch (tiled)"
    assert jnp.allclose(loss2, ref_loss2, atol=1e-2, rtol=1e-2), "loss mismatch (tiled)"

    print("KERNEL_OK")
</pallas_src>

<mosaic_0001>
module attributes {stable_mosaic.version = 11 : i64} {
  func.func @_sage_fused_kernel(%arg0: memref<32x32xi8, #tpu.memory_space<vmem>>, %arg1: memref<32x1xf32, #tpu.memory_space<vmem>>, %arg2: memref<32x128xbf16, #tpu.memory_space<vmem>>, %arg3: memref<256x128xbf16, #tpu.memory_space<vmem>>, %arg4: memref<1x128xf32, #tpu.memory_space<vmem>>, %arg5: memref<256x128xbf16, #tpu.memory_space<vmem>>, %arg6: memref<1x128xf32, #tpu.memory_space<vmem>>, %arg7: memref<128x128xbf16, #tpu.memory_space<vmem>>, %arg8: memref<1x128xf32, #tpu.memory_space<vmem>>, %arg9: memref<32x128xbf16, #tpu.memory_space<vmem>>, %arg10: memref<32x128xbf16, #tpu.memory_space<vmem>>, %arg11: memref<32x128xbf16, #tpu.memory_space<vmem>>, %arg12: memref<1x1xf32, #tpu.memory_space<smem>>) attributes {dimension_semantics = [], scalar_prefetch = 0 : i64, scratch_operands = 0 : i64, tpu.core_type = #tpu.core_type<tc>} {
    %c0 = arith.constant 0 : index
    %c0_0 = arith.constant 0 : index
    %0 = vector.load %arg0[%c0, %c0_0] : memref<32x32xi8, #tpu.memory_space<vmem>>, vector<32x32xi8>
    %1 = arith.sitofp %0 : vector<32x32xi8> to vector<32x32xbf16>
    %c0_1 = arith.constant 0 : index
    %c0_2 = arith.constant 0 : index
    %2 = vector.load %arg1[%c0_1, %c0_2] : memref<32x1xf32, #tpu.memory_space<vmem>>, vector<32x1xf32>
    %c0_3 = arith.constant 0 : index
    %c0_4 = arith.constant 0 : index
    %3 = vector.load %arg2[%c0_3, %c0_4] : memref<32x128xbf16, #tpu.memory_space<vmem>>, vector<32x128xbf16>
    %cst = arith.constant dense<0.000000e+00> : vector<32x128xf32>
    %4 = tpu.matmul %1, %3, %cst {dimension_numbers = #tpu.dot_dimension_numbers<[1], [0], [0], [1], [0, 0, 1, 1], [], []>} : vector<32x32xbf16>, vector<32x128xbf16>, vector<32x128xf32> -> vector<32x128xf32>
    %5 = vector.broadcast %2 : vector<32x1xf32> to vector<32x128xf32>
    %6 = arith.mulf %4, %5 : vector<32x128xf32>
    %7 = arith.truncf %6 : vector<32x128xf32> to vector<32x128xbf16>
    %8 = tpu.concatenate %7, %3 in 1 : vector<32x128xbf16>, vector<32x128xbf16> -> vector<32x256xbf16>
    %c0_5 = arith.constant 0 : index
    %c0_6 = arith.constant 0 : index
    %9 = vector.load %arg3[%c0_5, %c0_6] : memref<256x128xbf16, #tpu.memory_space<vmem>>, vector<256x128xbf16>
    %cst_7 = arith.constant dense<0.000000e+00> : vector<32x128xf32>
    %10 = tpu.matmul %8, %9, %cst_7 {dimension_numbers = #tpu.dot_dimension_numbers<[1], [0], [0], [1], [0, 0, 1, 1], [], []>} : vector<32x256xbf16>, vector<256x128xbf16>, vector<32x128xf32> -> vector<32x128xf32>
    %c0_8 = arith.constant 0 : index
    %c0_9 = arith.constant 0 : index
    %11 = vector.load %arg4[%c0_8, %c0_9] : memref<1x128xf32, #tpu.memory_space<vmem>>, vector<1x128xf32>
    %12 = vector.broadcast %11 : vector<1x128xf32> to vector<32x128xf32>
    %13 = arith.addf %10, %12 : vector<32x128xf32>
    %cst_10 = arith.constant 0.000000e+00 : f32
    %14 = vector.broadcast %cst_10 : f32 to vector<32x128xf32>
    %15 = arith.cmpf ogt, %13, %14 : vector<32x128xf32>
    %cst_11 = arith.constant 0.000000e+00 : f32
    %16 = vector.broadcast %cst_11 : f32 to vector<32x128xf32>
    %17 = arith.minimumf %13, %16 : vector<32x128xf32>
    %18 = math.exp %17 : vector<32x128xf32>
    %cst_12 = arith.constant 1.000000e+00 : f32
    %19 = vector.broadcast %cst_12 : f32 to vector<32x128xf32>
    %20 = arith.subf %18, %19 : vector<32x128xf32>
    %21 = arith.select %15, %13, %20 : vector<32x128xi1>, vector<32x128xf32>
    %22 = arith.truncf %21 : vector<32x128xf32> to vector<32x128xbf16>
    %cst_13 = arith.constant dense<0.000000e+00> : vector<32x128xf32>
    %23 = tpu.matmul %1, %22, %cst_13 {dimension_numbers = #tpu.dot_dimension_numbers<[1], [0], [0], [1], [0, 0, 1, 1], [], []>} : vector<32x32xbf16>, vector<32x128xbf16>, vector<32x128xf32> -> vector<32x128xf32>
    %24 = vector.broadcast %2 : vector<32x1xf32> to vector<32x128xf32>
    %25 = arith.mulf %23, %24 : vector<32x128xf32>
    %26 = arith.truncf %25 : vector<32x128xf32> to vector<32x128xbf16>
    %27 = tpu.concatenate %26, %22 in 1 : vector<32x128xbf16>, vector<32x128xbf16> -> vector<32x256xbf16>
    %c0_14 = arith.constant 0 : index
    %c0_15 = arith.constant 0 : index
    %28 = vector.load %arg5[%c0_14, %c0_15] : memref<256x128xbf16, #tpu.memory_space<vmem>>, vector<256x128xbf16>
    %cst_16 = arith.constant dense<0.000000e+00> : vector<32x128xf32>
    %29 = tpu.matmul %27, %28, %cst_16 {dimension_numbers = #tpu.dot_dimension_numbers<[1], [0], [0], [1], [0, 0, 1, 1], [], []>} : vector<32x256xbf16>, vector<256x128xbf16>, vector<32x128xf32> -> vector<32x128xf32>
    %c0_17 = arith.constant 0 : index
    %c0_18 = arith.constant 0 : index
    %30 = vector.load %arg6[%c0_17, %c0_18] : memref<1x128xf32, #tpu.memory_space<vmem>>, vector<1x128xf32>
    %31 = vector.broadcast %30 : vector<1x128xf32> to vector<32x128xf32>
    %32 = arith.addf %29, %31 : vector<32x128xf32>
    %33 = arith.truncf %32 : vector<32x128xf32> to vector<32x128xbf16>
    %c0_19 = arith.constant 0 : index
    %c0_20 = arith.constant 0 : index
    %34 = vector.load %arg10[%c0_19, %c0_20] : memref<32x128xbf16, #tpu.memory_space<vmem>>, vector<32x128xbf16>
    tpu.vector_store %arg10[%c0_19, %c0_20], %33 {strides = array<i32>} : memref<32x128xbf16, #tpu.memory_space<vmem>>, vector<32x128xbf16>,
    %35 = arith.truncf %32 : vector<32x128xf32> to vector<32x128xbf16>
    %c0_21 = arith.constant 0 : index
    %c0_22 = arith.constant 0 : index
    %36 = vector.load %arg7[%c0_21, %c0_22] : memref<128x128xbf16, #tpu.memory_space<vmem>>, vector<128x128xbf16>
    %cst_23 = arith.constant dense<0.000000e+00> : vector<32x128xf32>
    %37 = tpu.matmul %35, %36, %cst_23 {dimension_numbers = #tpu.dot_dimension_numbers<[1], [0], [0], [1], [0, 0, 1, 1], [], []>} : vector<32x128xbf16>, vector<128x128xbf16>, vector<32x128xf32> -> vector<32x128xf32>
    %c0_24 = arith.constant 0 : index
    %c0_25 = arith.constant 0 : index
    %38 = vector.load %arg8[%c0_24, %c0_25] : memref<1x128xf32, #tpu.memory_space<vmem>>, vector<1x128xf32>
    %39 = vector.broadcast %38 : vector<1x128xf32> to vector<32x128xf32>
    %40 = arith.addf %37, %39 : vector<32x128xf32>
    %41 = arith.truncf %40 : vector<32x128xf32> to vector<32x128xbf16>
    %c0_26 = arith.constant 0 : index
    %c0_27 = arith.constant 0 : index
    %42 = vector.load %arg11[%c0_26, %c0_27] : memref<32x128xbf16, #tpu.memory_space<vmem>>, vector<32x128xbf16>
    tpu.vector_store %arg11[%c0_26, %c0_27], %41 {strides = array<i32>} : memref<32x128xbf16, #tpu.memory_space<vmem>>, vector<32x128xbf16>,
    %cst_28 = arith.constant dense<0xFF800000> : vector<32xf32>
    %43 = vector.multi_reduction <maximumf>, %40, %cst_28 [1] : vector<32x128xf32> to vector<32xf32>
    %44 = vector.shape_cast %43 : vector<32xf32> to vector<32x1xf32>
    %45 = vector.broadcast %44 : vector<32x1xf32> to vector<32x128xf32>
    %46 = arith.subf %40, %45 : vector<32x128xf32>
    %47 = math.exp %46 : vector<32x128xf32>
    %cst_29 = arith.constant dense<0.000000e+00> : vector<32xf32>
    %48 = vector.multi_reduction <add>, %47, %cst_29 [1] : vector<32x128xf32> to vector<32xf32>
    %49 = vector.shape_cast %48 : vector<32xf32> to vector<32x1xf32>
    %50 = math.log %49 : vector<32x1xf32>
    %51 = arith.addf %44, %50 : vector<32x1xf32>
    %c0_30 = arith.constant 0 : index
    %c0_31 = arith.constant 0 : index
    %52 = vector.load %arg9[%c0_30, %c0_31] : memref<32x128xbf16, #tpu.memory_space<vmem>>, vector<32x128xbf16>
    %53 = arith.extf %52 : vector<32x128xbf16> to vector<32x128xf32>
    %54 = arith.mulf %40, %53 : vector<32x128xf32>
    %cst_32 = arith.constant dense<0.000000e+00> : vector<32xf32>
    %55 = vector.multi_reduction <add>, %54, %cst_32 [1] : vector<32x128xf32> to vector<32xf32>
    %56 = vector.shape_cast %55 : vector<32xf32> to vector<32x1xf32>
    %cst_33 = arith.constant dense<0.000000e+00> : vector<32xf32>
    %57 = vector.multi_reduction <add>, %53, %cst_33 [1] : vector<32x128xf32> to vector<32xf32>
    %58 = vector.shape_cast %57 : vector<32xf32> to vector<32x1xf32>
    %59 = arith.subf %51, %56 : vector<32x1xf32>
    %60 = arith.mulf %58, %59 : vector<32x1xf32>
    %61 = vector.shape_cast %60 : vector<32x1xf32> to vector<1x32x1xf32>
    %cst_34 = arith.constant dense<0.000000e+00> : vector<1xf32>
    %62 = vector.multi_reduction <add>, %61, %cst_34 [1, 2] : vector<1x32x1xf32> to vector<1xf32>
    %63 = vector.shape_cast %62 : vector<1xf32> to vector<1x1x1xf32>
    %64 = vector.extract %63[0, 0, 0] : f32 from vector<1x1x1xf32>
    %c0_35 = arith.constant 0 : index
    %c0_36 = arith.constant 0 : index
    %65 = memref.load %arg12[%c0_35, %c0_36] : memref<1x1xf32, #tpu.memory_space<smem>>
    memref.store %64, %arg12[%c0_35, %c0_36] : memref<1x1xf32, #tpu.memory_space<smem>>
    return
  }
}

</mosaic_0001>

<llo_original>
// kernel: tpu_custom_call.1
$region0: #{tpu_custom_call.1}
  #allocation0 [shape = 'u32[]', space=smem, size = 0x4, offset = 0x4, fixed_abs, tag = 'smem constant byte address 0x4 - core index']
  #allocation1 [shape = 'u32[72,128]{1,0:T(1,128)}', space=vmem, size = 0x9000, scoped, tag = 'internal scratch']
  %s0 = inlined_call_operand.hbm [shape: s8[32,32], index: 0, kind: input, shape index: {}]
  %s1 = inlined_call_operand.vmem [shape: f32[32,1], index: 1, kind: input, shape index: {}]
  %s2 = inlined_call_operand.vmem [shape: bf16[32,128], index: 2, kind: input, shape index: {}]
  %s3 = inlined_call_operand.hbm [shape: bf16[256,128], index: 3, kind: input, shape index: {}]
  %s4 = inlined_call_operand.vmem [shape: f32[1,128], index: 4, kind: input, shape index: {}]
  %s5 = inlined_call_operand.hbm [shape: bf16[256,128], index: 5, kind: input, shape index: {}]
  %s6 = inlined_call_operand.vmem [shape: f32[1,128], index: 6, kind: input, shape index: {}]
  %s7 = inlined_call_operand.hbm [shape: bf16[128,128], index: 7, kind: input, shape index: {}]
  %s8 = inlined_call_operand.vmem [shape: f32[1,128], index: 8, kind: input, shape index: {}]
  %s9 = inlined_call_operand.vmem [shape: bf16[32,128], index: 9, kind: input, shape index: {}]
  %s10 = inlined_call_operand.hbm [shape: bf16[32,128], index: 10, kind: output, shape index: {0}]
  %s11 = inlined_call_operand.hbm [shape: bf16[32,128], index: 11, kind: output, shape index: {1}]
  %s12 = inlined_call_operand.hbm [shape: f32[1,1], index: 12, kind: output, shape index: {2}]
  %13 = xla_tuple %s10, %s11, %s12
  %s14 = sld [smem:[#allocation0]]
  $region82: #{tpu_custom_call.1} parent=0
    _
  %s16 = ssub.s32 1, %s14
  %s17 = scalar_select 0, %s16, %s14
  $region1: #{tpu_custom_call.1} parent=0
    #allocation2 [shape = 'u8[4096]{0}', space=vmem, size = 0x1000, scoped, tag = 'input window, operand 0, single buffered']
    #allocation3 [shape = 's32[1]{0}', space=sflag, size = 0x4, scoped, tag = 'scoped memory for tpu_custom_call.1']
    #allocation4 [shape = 's32[1]{0}', space=sflag, size = 0x4, scoped, tag = 'scoped memory for tpu_custom_call.1']
    #allocation5 [shape = 's32[1]{0}', space=sflag, size = 0x4, scoped, tag = 'scoped memory for tpu_custom_call.1']
    #allocation6 [shape = 'u8[65536]{0}', space=vmem, size = 0x10000, scoped, tag = 'input window, operand 3, single buffered']
    #allocation7 [shape = 's32[1]{0}', space=sflag, size = 0x4, scoped, tag = 'scoped memory for tpu_custom_call.1']
    #allocation8 [shape = 'u8[65536]{0}', space=vmem, size = 0x10000, scoped, tag = 'input window, operand 5, single buffered']
    #allocation9 [shape = 'u8[32768]{0}', space=vmem, size = 0x8000, scoped, tag = 'input window, operand 7, single buffered']
    #allocation10 [shape = 's32[1]{0}', space=sflag, size = 0x4, scoped, tag = 'scoped memory for tpu_custom_call.1']
    #allocation11 [shape = 'u8[8192]{0}', space=vmem, size = 0x2000, scoped, tag = 'output window, operand 0, single buffered']
    #allocation12 [shape = 'u8[8192]{0}', space=vmem, size = 0x2000, scoped, tag = 'output window, operand 1, single buffered']
    #allocation13 [shape = 's32[1]{0}', space=sflag, size = 0x4, scoped, tag = 'scoped memory for tpu_custom_call.1']
    #allocation14 [shape = 'u8[512]{0}', space=smem, size = 0x200, scoped, tag = 'output window, operand 2, single buffered']
    %18 = vsyncpa [#allocation3], 0
    %19 = vsyncpa [#allocation7], 0
    %20 = vsyncpa [#allocation10], 0
    %21 = vsyncpa [#allocation4], 0
    %22 = vsyncpa [#allocation13], 0
    %23 = vsyncpa [#allocation5], 0
    // Predicated region
    $region2: #{tpu_custom_call.1} parent=1 // pred_check
      _
    $region3: #{tpu_custom_call.1} parent=1 // pred_check_branch
      %25 = sbr.rel (0) target = $region5
    $region4: #{tpu_custom_call.1} parent=1 // pred_region
      %27 = vsyncadd [#allocation3], 0
      %s29 = sshll.u32 %s0, 4
      %s30 = int_to_ptr.hbm [resolvable:$true] %s29
      %s31 = sshll.u32 [#allocation2], 4
      %s32 = int_to_ptr.vmem [resolvable:$true] %s31
      %34 = dma.hbm_to_vmem [thread:$0]  %s30, 128, %s32, [#allocation3]
    $region5: #{tpu_custom_call.1} parent=1 // pred_fallthru
      _
    // Predicated region
    $region6: #{tpu_custom_call.1} parent=1 // pred_check
      _
    $region7: #{tpu_custom_call.1} parent=1 // pred_check_branch
      %36 = sbr.rel (0) target = $region9
    $region8: #{tpu_custom_call.1} parent=1 // pred_region
      _
    $region9: #{tpu_custom_call.1} parent=1 // pred_fallthru
      _
    // Predicated region
    $region10: #{tpu_custom_call.1} parent=1 // pred_check
      _
    $region11: #{tpu_custom_call.1} parent=1 // pred_check_branch
      %38 = sbr.rel (0) target = $region13
    $region12: #{tpu_custom_call.1} parent=1 // pred_region
      _
    $region13: #{tpu_custom_call.1} parent=1 // pred_fallthru
      _
    // Predicated region
    $region14: #{tpu_custom_call.1} parent=1 // pred_check
      _
    $region15: #{tpu_custom_call.1} parent=1 // pred_check_branch
      %40 = sbr.rel (0) target = $region17
    $region16: #{tpu_custom_call.1} parent=1 // pred_region
      %42 = vsyncadd [#allocation7], 0
      %s43 = sshll.u32 %s3, 4
      %s44 = int_to_ptr.hbm [resolvable:$true] %s43
      %s45 = sshll.u32 [#allocation6], 4
      %s46 = int_to_ptr.vmem [resolvable:$true] %s45
      %51 = dma.hbm_to_vmem [thread:$0]  %s44, 2048, %s46, [#allocation7], 64, 64, 4
    $region17: #{tpu_custom_call.1} parent=1 // pred_fallthru
      _
    // Predicated region
    $region18: #{tpu_custom_call.1} parent=1 // pred_check
      _
    $region19: #{tpu_custom_call.1} parent=1 // pred_check_branch
      %53 = sbr.rel (0) target = $region21
    $region20: #{tpu_custom_call.1} parent=1 // pred_region
      _
    $region21: #{tpu_custom_call.1} parent=1 // pred_fallthru
      _
    // Predicated region
    $region22: #{tpu_custom_call.1} parent=1 // pred_check
      _
    $region23: #{tpu_custom_call.1} parent=1 // pred_check_branch
      %55 = sbr.rel (0) target = $region25
    $region24: #{tpu_custom_call.1} parent=1 // pred_region
      %57 = vsyncadd [#allocation7], 0
      %s58 = sshll.u32 %s5, 4
      %s59 = int_to_ptr.hbm [resolvable:$true] %s58
      %s60 = sshll.u32 [#allocation8], 4
      %s61 = int_to_ptr.vmem [resolvable:$true] %s60
      %66 = dma.hbm_to_vmem [thread:$0]  %s59, 2048, %s61, [#allocation7], 64, 64, 4
    $region25: #{tpu_custom_call.1} parent=1 // pred_fallthru
      _
    // Predicated region
    $region26: #{tpu_custom_call.1} parent=1 // pred_check
      _
    $region27: #{tpu_custom_call.1} parent=1 // pred_check_branch
      %68 = sbr.rel (0) target = $region29
    $region28: #{tpu_custom_call.1} parent=1 // pred_region
      _
    $region29: #{tpu_custom_call.1} parent=1 // pred_fallthru
      _
    // Predicated region
    $region30: #{tpu_custom_call.1} parent=1 // pred_check
      _
    $region31: #{tpu_custom_call.1} parent=1 // pred_check_branch
      %70 = sbr.rel (0) target = $region33
    $region32: #{tpu_custom_call.1} parent=1 // pred_region
      %72 = vsyncadd [#allocation10], 0
      %s73 = sshll.u32 %s7, 4
      %s74 = int_to_ptr.hbm [resolvable:$true] %s73
      %s75 = sshll.u32 [#allocation9], 4
      %s76 = int_to_ptr.vmem [resolvable:$true] %s75
      %81 = dma.hbm_to_vmem [thread:$0]  %s74, 1024, %s76, [#allocation10], 64, 64, 4
    $region33: #{tpu_custom_call.1} parent=1 // pred_fallthru
      _
    // Predicated region
    $region34: #{tpu_custom_call.1} parent=1 // pred_check
      _
    $region35: #{tpu_custom_call.1} parent=1 // pred_check_branch
      %83 = sbr.rel (0) target = $region37
    $region36: #{tpu_custom_call.1} parent=1 // pred_region
      _
    $region37: #{tpu_custom_call.1} parent=1 // pred_fallthru
      _
    // Predicated region
    $region38: #{tpu_custom_call.1} parent=1 // pred_check
      _
    $region39: #{tpu_custom_call.1} parent=1 // pred_check_branch
      %85 = sbr.rel (0) target = $region41
    $region40: #{tpu_custom_call.1} parent=1 // pred_region
      _
    $region41: #{tpu_custom_call.1} parent=1 // pred_fallthru
      _
    // Predicated region
    $region42: #{tpu_custom_call.1} parent=1 // pred_check
      _
    $region43: #{tpu_custom_call.1} parent=1 // pred_check_branch
      %87 = sbr.rel (0) target = $region45
    $region44: #{tpu_custom_call.1} parent=1 // pred_region
      %89 = dma.done [#allocation3], 128
    $region45: #{tpu_custom_call.1} parent=1 // pred_fallthru
      _
    // Predicated region
    $region46: #{tpu_custom_call.1} parent=1 // pred_check
      _
    $region47: #{tpu_custom_call.1} parent=1 // pred_check_branch
      %91 = sbr.rel (0) target = $region49
    $region48: #{tpu_custom_call.1} parent=1 // pred_region
      %93 = dma.done [#allocation7], 2048
    $region49: #{tpu_custom_call.1} parent=1 // pred_fallthru
      _
    // Predicated region
    $region50: #{tpu_custom_call.1} parent=1 // pred_check
      _
    $region51: #{tpu_custom_call.1} parent=1 // pred_check_branch
      %95 = sbr.rel (0) target = $region53
    $region52: #{tpu_custom_call.1} parent=1 // pred_region
      %97 = dma.done [#allocation7], 2048
    $region53: #{tpu_custom_call.1} parent=1 // pred_fallthru
      _
    // Predicated region
    $region54: #{tpu_custom_call.1} parent=1 // pred_check
      _
    $region55: #{tpu_custom_call.1} parent=1 // pred_check_branch
      %99 = sbr.rel (0) target = $region57
    $region56: #{tpu_custom_call.1} parent=1 // pred_region
      %101 = dma.done [#allocation10], 1024
    $region57: #{tpu_custom_call.1} parent=1 // pred_fallthru
      _
    %v103 = vld [vmem:[#allocation2] sm:$0xff]
    %v104 = vunpack.c.0.s8 %v103
    %v105 = vunpack.c.1.s8 %v103
    %v106 = vunpack.c.2.s8 %v103
    %v107 = vunpack.c.3.s8 %v103
    %v108 = vcvt.s32.f32 %v104
    %v109 = vcvt.s32.f32 %v105
    %v110 = vcvt.s32.f32 %v106
    %v111 = vcvt.s32.f32 %v107
    %v112 = vpack.c.bf16 %v109, %v108
    %v113 = vpack.c.bf16 %v111, %v110
    %v114 = vld [vmem:[%s1] sm:$0xff]
    %v115 = vld [vmem:[%s1 + $0x8] sm:$0xff]
    %v116 = vld [vmem:[%s1 + $0x10] sm:$0xff]
    %v117 = vld [vmem:[%s1 + $0x18] sm:$0xff]
    %v118 = vld [vmem:[%s2] sm:$0xf]
    %v119 = vld [vmem:[%s2 + $0x4] sm:$0xf]
    %v120 = vld [vmem:[%s2 + $0x8] sm:$0xf]
    %v121 = vld [vmem:[%s2 + $0xc] sm:$0xf]
    %v126 = vunpack.c.l.b16 %v118
    %v127 = vunpack.c.l.b16 %v119
    %v128 = vunpack.c.l.b16 %v120
    %v129 = vunpack.c.l.b16 %v121
    %v130 = vpack.c.b16 %v127, %v126
    %v131 = vpack.c.b16 %v129, %v128
    %vm134 = vcmask 261120
    %v136 = vsel %vm134, %v112, 0
    %v139 = vsel %vm134, %v113, 0
    %141 = vmatpush.bf16.msra.mxu0 0
    %142 = vmatpush.bf16.msra.mxu0 0
    %143 = vmatpush.bf16.msra.mxu0 0
    %144 = vmatpush.bf16.msra.mxu0 0
    %145 = vmatpush.bf16.msra.mxu0 0
    %146 = vmatpush.bf16.msra.mxu0 0
    %147 = vmatpush.bf16.msra.mxu0 %v131
    %148 = vmatpush.bf16.msra.mxu0 %v130
    %149 = vmatmul.bf16.gmra.mxu0 %v136
    %v150 = vpop.f32.mrf.mxu0
    %v151 = vadd.f32 0.0, %v150
    %v152 = vpop.f32.mrf.mxu0
    %v153 = vadd.f32 0.0, %v152
    %154 = vmatmul.bf16.gmra.mxu0 %v139
    %v155 = vpop.f32.mrf.mxu0
    %v156 = vadd.f32 0.0, %v155
    %v157 = vpop.f32.mrf.mxu0
    %v158 = vadd.f32 0.0, %v157
    %159 = vdwg.mxu0
    %161 = vset.pattern.permute.xlu0 0
    %162 = vperm.xlu0 %161, %v114
    %v163 = vpop.permute.xlu0 %162
    %166 = vset.pattern.permute.xlu0 0
    %167 = vperm.xlu0 %166, %v115
    %v168 = vpop.permute.xlu0 %167
    %171 = vset.pattern.permute.xlu0 0
    %172 = vperm.xlu0 %171, %v116
    %v173 = vpop.permute.xlu0 %172
    %176 = vset.pattern.permute.xlu0 0
    %177 = vperm.xlu0 %176, %v117
    %v178 = vpop.permute.xlu0 %177
    %v180 = vmul.f32 %v151, %v163
    %v181 = vmul.f32 %v153, %v168
    %v182 = vmul.f32 %v156, %v173
    %v183 = vmul.f32 %v158, %v178
    %v184 = vpack.c.bf16 %v180, %v180
    %v185 = vpack.c.bf16 %v181, %v181
    %v186 = vpack.c.bf16 %v182, %v182
    %v187 = vpack.c.bf16 %v183, %v183
    %v192 = vunpack.c.l.b16 %v184
    %v193 = vunpack.c.l.b16 %v185
    %v194 = vunpack.c.l.b16 %v186
    %v195 = vunpack.c.l.b16 %v187
    %v196 = vpack.c.b16 %v193, %v192
    %v197 = vpack.c.b16 %v195, %v194
    %v200 = vld [vmem:[#allocation6] sm:$0xf]
    %v201 = vld [vmem:[#allocation6 + $0x4] sm:$0xf]
    %v202 = vld [vmem:[#allocation6 + $0x8] sm:$0xf]
    %v203 = vld [vmem:[#allocation6 + $0xc] sm:$0xf]
    %v204 = vld [vmem:[#allocation6 + $0x10] sm:$0xf]
    %v205 = vld [vmem:[#allocation6 + $0x14] sm:$0xf]
    %v206 = vld [vmem:[#allocation6 + $0x18] sm:$0xf]
    %v207 = vld [vmem:[#allocation6 + $0x1c] sm:$0xf]
    %v208 = vld [vmem:[#allocation6 + $0x20] sm:$0xf]
    %v209 = vld [vmem:[#allocation6 + $0x24] sm:$0xf]
    %v210 = vld [vmem:[#allocation6 + $0x28] sm:$0xf]
    %v211 = vld [vmem:[#allocation6 + $0x2c] sm:$0xf]
    %v212 = vld [vmem:[#allocation6 + $0x30] sm:$0xf]
    %v213 = vld [vmem:[#allocation6 + $0x34] sm:$0xf]
    %v214 = vld [vmem:[#allocation6 + $0x38] sm:$0xf]
    %v215 = vld [vmem:[#allocation6 + $0x3c] sm:$0xf]
    %v216 = vld [vmem:[#allocation6 + $0x40] sm:$0xf]
    %v217 = vld [vmem:[#allocation6 + $0x44] sm:$0xf]
    %v218 = vld [vmem:[#allocation6 + $0x48] sm:$0xf]
    %v219 = vld [vmem:[#allocation6 + $0x4c] sm:$0xf]
    %v220 = vld [vmem:[#allocation6 + $0x50] sm:$0xf]
    %v221 = vld [vmem:[#allocation6 + $0x54] sm:$0xf]
    %v222 = vld [vmem:[#allocation6 + $0x58] sm:$0xf]
    %v223 = vld [vmem:[#allocation6 + $0x5c] sm:$0xf]
    %v224 = vld [vmem:[#allocation6 + $0x60] sm:$0xf]
    %v225 = vld [vmem:[#allocation6 + $0x64] sm:$0xf]
    %v226 = vld [vmem:[#allocation6 + $0x68] sm:$0xf]
    %v227 = vld [vmem:[#allocation6 + $0x6c] sm:$0xf]
    %v228 = vld [vmem:[#allocation6 + $0x70] sm:$0xf]
    %v229 = vld [vmem:[#allocation6 + $0x74] sm:$0xf]
    %v230 = vld [vmem:[#allocation6 + $0x78] sm:$0xf]
    %v231 = vld [vmem:[#allocation6 + $0x7c] sm:$0xf]
    %v232 = vld [vmem:[%s4] sm:$0x1]
    %v234 = vperm.slane %v232, 0
    %v268 = vunpack.c.l.b16 %v200
    %v269 = vunpack.c.l.b16 %v201
    %v270 = vunpack.c.l.b16 %v202
    %v271 = vunpack.c.l.b16 %v203
    %v272 = vunpack.c.l.b16 %v204
    %v273 = vunpack.c.l.b16 %v205
    %v274 = vunpack.c.l.b16 %v206
    %v275 = vunpack.c.l.b16 %v207
    %v276 = vunpack.c.l.b16 %v208
    %v277 = vunpack.c.l.b16 %v209
    %v278 = vunpack.c.l.b16 %v210
    %v279 = vunpack.c.l.b16 %v211
    %v280 = vunpack.c.l.b16 %v212
    %v281 = vunpack.c.l.b16 %v213
    %v282 = vunpack.c.l.b16 %v214
    %v283 = vunpack.c.l.b16 %v215
    %v284 = vunpack.c.l.b16 %v216
    %v285 = vunpack.c.l.b16 %v217
    %v286 = vunpack.c.l.b16 %v218
    %v287 = vunpack.c.l.b16 %v219
    %v288 = vunpack.c.l.b16 %v220
    %v289 = vunpack.c.l.b16 %v221
    %v290 = vunpack.c.l.b16 %v222
    %v291 = vunpack.c.l.b16 %v223
    %v292 = vunpack.c.l.b16 %v224
    %v293 = vunpack.c.l.b16 %v225
    %v294 = vunpack.c.l.b16 %v226
    %v295 = vunpack.c.l.b16 %v227
    %v296 = vunpack.c.l.b16 %v228
    %v297 = vunpack.c.l.b16 %v229
    %v298 = vunpack.c.l.b16 %v230
    %v299 = vunpack.c.l.b16 %v231
    %v300 = vpack.c.b16 %v269, %v268
    %v301 = vpack.c.b16 %v271, %v270
    %v302 = vpack.c.b16 %v273, %v272
    %v303 = vpack.c.b16 %v275, %v274
    %v304 = vpack.c.b16 %v277, %v276
    %v305 = vpack.c.b16 %v279, %v278
    %v306 = vpack.c.b16 %v281, %v280
    %v307 = vpack.c.b16 %v283, %v282
    %v308 = vpack.c.b16 %v285, %v284
    %v309 = vpack.c.b16 %v287, %v286
    %v310 = vpack.c.b16 %v289, %v288
    %v311 = vpack.c.b16 %v291, %v290
    %v312 = vpack.c.b16 %v293, %v292
    %v313 = vpack.c.b16 %v295, %v294
    %v314 = vpack.c.b16 %v297, %v296
    %v315 = vpack.c.b16 %v299, %v298
    %332 = vmatpush.bf16.msra.mxu0 %v307
    %333 = vmatpush.bf16.msra.mxu0 %v306
    %334 = vmatpush.bf16.msra.mxu0 %v305
    %335 = vmatpush.bf16.msra.mxu0 %v304
    %336 = vmatpush.bf16.msra.mxu0 %v303
    %337 = vmatpush.bf16.msra.mxu0 %v302
    %338 = vmatpush.bf16.msra.mxu0 %v301
    %339 = vmatpush.bf16.msra.mxu0 %v300
    %340 = vmatmul.bf16.gmra.mxu0 %v196
    %v341 = vpop.f32.mrf.mxu0
    %v342 = vadd.f32 %v234, %v341
    %v343 = vpop.f32.mrf.mxu0
    %v344 = vadd.f32 %v234, %v343
    %345 = vmatmul.bf16.gmra.mxu0 %v197
    %v346 = vpop.f32.mrf.mxu0
    %v347 = vadd.f32 %v234, %v346
    %v348 = vpop.f32.mrf.mxu0
    %v349 = vadd.f32 %v234, %v348
    %350 = vdwg.mxu0
    %351 = vmatpush.bf16.msra.mxu0 %v315
    %352 = vmatpush.bf16.msra.mxu0 %v314
    %353 = vmatpush.bf16.msra.mxu0 %v313
    %354 = vmatpush.bf16.msra.mxu0 %v312
    %355 = vmatpush.bf16.msra.mxu0 %v311
    %356 = vmatpush.bf16.msra.mxu0 %v310
    %357 = vmatpush.bf16.msra.mxu0 %v309
    %358 = vmatpush.bf16.msra.mxu0 %v308
    %359 = vmatmul.bf16.gmra.mxu0 %v130
    %v360 = vpop.f32.mrf.mxu0
    %v361 = vadd.f32 %v342, %v360
    %v362 = vpop.f32.mrf.mxu0
    %v363 = vadd.f32 %v344, %v362
    %364 = vmatmul.bf16.gmra.mxu0 %v131
    %v365 = vpop.f32.mrf.mxu0
    %v366 = vadd.f32 %v347, %v365
    %v367 = vpop.f32.mrf.mxu0
    %v368 = vadd.f32 %v349, %v367
    %369 = vdwg.mxu0
    %vm370 = vcmp.gt.f32.partialorder %v361, 0.0
    %vm371 = vcmp.gt.f32.partialorder %v363, 0.0
    %vm372 = vcmp.gt.f32.partialorder %v366, 0.0
    %vm373 = vcmp.gt.f32.partialorder %v368, 0.0
    %v374 = vmin.f32 %v361, 0.0
    %v375 = vmin.f32 %v363, 0.0
    %v376 = vmin.f32 %v366, 0.0
    %v377 = vmin.f32 %v368, 0.0
    %v378 = vmul.f32 %v374, 1.442695
    %v379 = vpow.pop %v378
    %v380 = vmul.f32 %v375, 1.442695
    %v381 = vpow.pop %v380
    %v382 = vmul.f32 %v376, 1.442695
    %v383 = vpow.pop %v382
    %v384 = vmul.f32 %v377, 1.442695
    %v385 = vpow.pop %v384
    %v386 = vsub.f32 %v379, 1.0
    %v387 = vsub.f32 %v381, 1.0
    %v388 = vsub.f32 %v383, 1.0
    %v389 = vsub.f32 %v385, 1.0
    %v390 = vsel %vm370, %v361, %v386
    %v391 = vsel %vm371, %v363, %v387
    %v392 = vsel %vm372, %v366, %v388
    %v393 = vsel %vm373, %v368, %v389
    %v394 = vpack.c.bf16 %v390, %v390
    %v395 = vpack.c.bf16 %v391, %v391
    %v396 = vpack.c.bf16 %v392, %v392
    %v397 = vpack.c.bf16 %v393, %v393
    %v402 = vunpack.c.l.b16 %v394
    %v403 = vunpack.c.l.b16 %v395
    %v404 = vunpack.c.l.b16 %v396
    %v405 = vunpack.c.l.b16 %v397
    %v406 = vpack.c.b16 %v403, %v402
    %v407 = vpack.c.b16 %v405, %v404
    %410 = vmatpush.bf16.msra.mxu0 0
    %411 = vmatpush.bf16.msra.mxu0 0
    %412 = vmatpush.bf16.msra.mxu0 0
    %413 = vmatpush.bf16.msra.mxu0 0
    %414 = vmatpush.bf16.msra.mxu0 0
    %415 = vmatpush.bf16.msra.mxu0 0
    %416 = vmatpush.bf16.msra.mxu0 %v407
    %417 = vmatpush.bf16.msra.mxu0 %v406
    %418 = vmatmul.bf16.gmra.mxu0 %v136
    %v419 = vpop.f32.mrf.mxu0
    %v420 = vadd.f32 0.0, %v419
    %v421 = vpop.f32.mrf.mxu0
    %v422 = vadd.f32 0.0, %v421
    %423 = vmatmul.bf16.gmra.mxu0 %v139
    %v424 = vpop.f32.mrf.mxu0
    %v425 = vadd.f32 0.0, %v424
    %v426 = vpop.f32.mrf.mxu0
    %v427 = vadd.f32 0.0, %v426
    %428 = vdwg.mxu0
    %v429 = vmul.f32 %v420, %v163
    %v430 = vmul.f32 %v422, %v168
    %v431 = vmul.f32 %v425, %v173
    %v432 = vmul.f32 %v427, %v178
    %v433 = vpack.c.bf16 %v429, %v429
    %v434 = vpack.c.bf16 %v430, %v430
    %v435 = vpack.c.bf16 %v431, %v431
    %v436 = vpack.c.bf16 %v432, %v432
    %v441 = vunpack.c.l.b16 %v433
    %v442 = vunpack.c.l.b16 %v434
    %v443 = vunpack.c.l.b16 %v435
    %v444 = vunpack.c.l.b16 %v436
    %v445 = vpack.c.b16 %v442, %v441
    %v446 = vpack.c.b16 %v444, %v443
    %v449 = vld [vmem:[#allocation8] sm:$0xf]
    %v450 = vld [vmem:[#allocation8 + $0x4] sm:$0xf]
    %v451 = vld [vmem:[#allocation8 + $0x8] sm:$0xf]
    %v452 = vld [vmem:[#allocation8 + $0xc] sm:$0xf]
    %v453 = vld [vmem:[#allocation8 + $0x10] sm:$0xf]
    %v454 = vld [vmem:[#allocation8 + $0x14] sm:$0xf]
    %v455 = vld [vmem:[#allocation8 + $0x18] sm:$0xf]
    %v456 = vld [vmem:[#allocation8 + $0x1c] sm:$0xf]
    %v457 = vld [vmem:[#allocation8 + $0x20] sm:$0xf]
    %v458 = vld [vmem:[#allocation8 + $0x24] sm:$0xf]
    %v459 = vld [vmem:[#allocation8 + $0x28] sm:$0xf]
    %v460 = vld [vmem:[#allocation8 + $0x2c] sm:$0xf]
    %v461 = vld [vmem:[#allocation8 + $0x30] sm:$0xf]
    %v462 = vld [vmem:[#allocation8 + $0x34] sm:$0xf]
    %v463 = vld [vmem:[#allocation8 + $0x38] sm:$0xf]
    %v464 = vld [vmem:[#allocation8 + $0x3c] sm:$0xf]
    %v465 = vld [vmem:[#allocation8 + $0x40] sm:$0xf]
    %v466 = vld [vmem:[#allocation8 + $0x44] sm:$0xf]
    %v467 = vld [vmem:[#allocation8 + $0x48] sm:$0xf]
    %v468 = vld [vmem:[#allocation8 + $0x4c] sm:$0xf]
    %v469 = vld [vmem:[#allocation8 + $0x50] sm:$0xf]
    %v470 = vld [vmem:[#allocation8 + $0x54] sm:$0xf]
    %v471 = vld [vmem:[#allocation8 + $0x58] sm:$0xf]
    %v472 = vld [vmem:[#allocation8 + $0x5c] sm:$0xf]
    %v473 = vld [vmem:[#allocation8 + $0x60] sm:$0xf]
    %v474 = vld [vmem:[#allocation8 + $0x64] sm:$0xf]
    %v475 = vld [vmem:[#allocation8 + $0x68] sm:$0xf]
    %v476 = vld [vmem:[#allocation8 + $0x6c] sm:$0xf]
    %v477 = vld [vmem:[#allocation8 + $0x70] sm:$0xf]
    %v478 = vld [vmem:[#allocation8 + $0x74] sm:$0xf]
    %v479 = vld [vmem:[#allocation8 + $0x78] sm:$0xf]
    %v480 = vld [vmem:[#allocation8 + $0x7c] sm:$0xf]
    %v481 = vld [vmem:[%s6] sm:$0x1]
    %v483 = vperm.slane %v481, 0
    %v517 = vunpack.c.l.b16 %v449
    %v518 = vunpack.c.l.b16 %v450
    %v519 = vunpack.c.l.b16 %v451
    %v520 = vunpack.c.l.b16 %v452
    %v521 = vunpack.c.l.b16 %v453
    %v522 = vunpack.c.l.b16 %v454
    %v523 = vunpack.c.l.b16 %v455
    %v524 = vunpack.c.l.b16 %v456
    %v525 = vunpack.c.l.b16 %v457
    %v526 = vunpack.c.l.b16 %v458
    %v527 = vunpack.c.l.b16 %v459
    %v528 = vunpack.c.l.b16 %v460
    %v529 = vunpack.c.l.b16 %v461
    %v530 = vunpack.c.l.b16 %v462
    %v531 = vunpack.c.l.b16 %v463
    %v532 = vunpack.c.l.b16 %v464
    %v533 = vunpack.c.l.b16 %v465
    %v534 = vunpack.c.l.b16 %v466
    %v535 = vunpack.c.l.b16 %v467
    %v536 = vunpack.c.l.b16 %v468
    %v537 = vunpack.c.l.b16 %v469
    %v538 = vunpack.c.l.b16 %v470
    %v539 = vunpack.c.l.b16 %v471
    %v540 = vunpack.c.l.b16 %v472
    %v541 = vunpack.c.l.b16 %v473
    %v542 = vunpack.c.l.b16 %v474
    %v543 = vunpack.c.l.b16 %v475
    %v544 = vunpack.c.l.b16 %v476
    %v545 = vunpack.c.l.b16 %v477
    %v546 = vunpack.c.l.b16 %v478
    %v547 = vunpack.c.l.b16 %v479
    %v548 = vunpack.c.l.b16 %v480
    %v549 = vpack.c.b16 %v518, %v517
    %v550 = vpack.c.b16 %v520, %v519
    %v551 = vpack.c.b16 %v522, %v521
    %v552 = vpack.c.b16 %v524, %v523
    %v553 = vpack.c.b16 %v526, %v525
    %v554 = vpack.c.b16 %v528, %v527
    %v555 = vpack.c.b16 %v530, %v529
    %v556 = vpack.c.b16 %v532, %v531
    %v557 = vpack.c.b16 %v534, %v533
    %v558 = vpack.c.b16 %v536, %v535
    %v559 = vpack.c.b16 %v538, %v537
    %v560 = vpack.c.b16 %v540, %v539
    %v561 = vpack.c.b16 %v542, %v541
    %v562 = vpack.c.b16 %v544, %v543
    %v563 = vpack.c.b16 %v546, %v545
    %v564 = vpack.c.b16 %v548, %v547
    %581 = vmatpush.bf16.msra.mxu0 %v556
    %582 = vmatpush.bf16.msra.mxu0 %v555
    %583 = vmatpush.bf16.msra.mxu0 %v554
    %584 = vmatpush.bf16.msra.mxu0 %v553
    %585 = vmatpush.bf16.msra.mxu0 %v552
    %586 = vmatpush.bf16.msra.mxu0 %v551
    %587 = vmatpush.bf16.msra.mxu0 %v550
    %588 = vmatpush.bf16.msra.mxu0 %v549
    %589 = vmatmul.bf16.gmra.mxu0 %v445
    %v590 = vpop.f32.mrf.mxu0
    %v591 = vadd.f32 %v483, %v590
    %v592 = vpop.f32.mrf.mxu0
    %v593 = vadd.f32 %v483, %v592
    %594 = vmatmul.bf16.gmra.mxu0 %v446
    %v595 = vpop.f32.mrf.mxu0
    %v596 = vadd.f32 %v483, %v595
    %v597 = vpop.f32.mrf.mxu0
    %v598 = vadd.f32 %v483, %v597
    %599 = vdwg.mxu0
    %600 = vmatpush.bf16.msra.mxu0 %v564
    %601 = vmatpush.bf16.msra.mxu0 %v563
    %602 = vmatpush.bf16.msra.mxu0 %v562
    %603 = vmatpush.bf16.msra.mxu0 %v561
    %604 = vmatpush.bf16.msra.mxu0 %v560
    %605 = vmatpush.bf16.msra.mxu0 %v559
    %606 = vmatpush.bf16.msra.mxu0 %v558
    %607 = vmatpush.bf16.msra.mxu0 %v557
    %608 = vmatmul.bf16.gmra.mxu0 %v406
    %v609 = vpop.f32.mrf.mxu0
    %v610 = vadd.f32 %v591, %v609
    %v611 = vpop.f32.mrf.mxu0
    %v612 = vadd.f32 %v593, %v611
    %613 = vmatmul.bf16.gmra.mxu0 %v407
    %v614 = vpop.f32.mrf.mxu0
    %v615 = vadd.f32 %v596, %v614
    %v616 = vpop.f32.mrf.mxu0
    %v617 = vadd.f32 %v598, %v616
    %618 = vdwg.mxu0
    %v619 = vpack.c.bf16 %v610, %v610
    %v620 = vpack.c.bf16 %v612, %v612
    %v621 = vpack.c.bf16 %v615, %v615
    %v622 = vpack.c.bf16 %v617, %v617
    %623 = vst [vmem:[#allocation11] sm:$0xf] %v619
    %624 = vst [vmem:[#allocation11 + $0x4] sm:$0xf] %v620
    %625 = vst [vmem:[#allocation11 + $0x8] sm:$0xf] %v621
    %626 = vst [vmem:[#allocation11 + $0xc] sm:$0xf] %v622
    %v627 = vld [vmem:[#allocation9] sm:$0xf]
    %v628 = vld [vmem:[#allocation9 + $0x4] sm:$0xf]
    %v629 = vld [vmem:[#allocation9 + $0x8] sm:$0xf]
    %v630 = vld [vmem:[#allocation9 + $0xc] sm:$0xf]
    %v631 = vld [vmem:[#allocation9 + $0x10] sm:$0xf]
    %v632 = vld [vmem:[#allocation9 + $0x14] sm:$0xf]
    %v633 = vld [vmem:[#allocation9 + $0x18] sm:$0xf]
    %v634 = vld [vmem:[#allocation9 + $0x1c] sm:$0xf]
    %v635 = vld [vmem:[#allocation9 + $0x20] sm:$0xf]
    %v636 = vld [vmem:[#allocation9 + $0x24] sm:$0xf]
    %v637 = vld [vmem:[#allocation9 + $0x28] sm:$0xf]
    %v638 = vld [vmem:[#allocation9 + $0x2c] sm:$0xf]
    %v639 = vld [vmem:[#allocation9 + $0x30] sm:$0xf]
    %v640 = vld [vmem:[#allocation9 + $0x34] sm:$0xf]
    %v641 = vld [vmem:[#allocation9 + $0x38] sm:$0xf]
    %v642 = vld [vmem:[#allocation9 + $0x3c] sm:$0xf]
    %v643 = vld [vmem:[%s8] sm:$0x1]
    %v645 = vperm.slane %v643, 0
    %v651 = vunpack.c.l.b16 %v619
    %v652 = vunpack.c.l.b16 %v620
    %v653 = vunpack.c.l.b16 %v621
    %v654 = vunpack.c.l.b16 %v622
    %v655 = vpack.c.b16 %v652, %v651
    %v656 = vpack.c.b16 %v654, %v653
    %v675 = vunpack.c.l.b16 %v627
    %v676 = vunpack.c.l.b16 %v628
    %v677 = vunpack.c.l.b16 %v629
    %v678 = vunpack.c.l.b16 %v630
    %v679 = vunpack.c.l.b16 %v631
    %v680 = vunpack.c.l.b16 %v632
    %v681 = vunpack.c.l.b16 %v633
    %v682 = vunpack.c.l.b16 %v634
    %v683 = vunpack.c.l.b16 %v635
    %v684 = vunpack.c.l.b16 %v636
    %v685 = vunpack.c.l.b16 %v637
    %v686 = vunpack.c.l.b16 %v638
    %v687 = vunpack.c.l.b16 %v639
    %v688 = vunpack.c.l.b16 %v640
    %v689 = vunpack.c.l.b16 %v641
    %v690 = vunpack.c.l.b16 %v642
    %v691 = vpack.c.b16 %v676, %v675
    %v692 = vpack.c.b16 %v678, %v677
    %v693 = vpack.c.b16 %v680, %v679
    %v694 = vpack.c.b16 %v682, %v681
    %v695 = vpack.c.b16 %v684, %v683
    %v696 = vpack.c.b16 %v686, %v685
    %v697 = vpack.c.b16 %v688, %v687
    %v698 = vpack.c.b16 %v690, %v689
    %707 = vmatpush.bf16.msra.mxu0 %v698
    %708 = vmatpush.bf16.msra.mxu0 %v697
    %709 = vmatpush.bf16.msra.mxu0 %v696
    %710 = vmatpush.bf16.msra.mxu0 %v695
    %711 = vmatpush.bf16.msra.mxu0 %v694
    %712 = vmatpush.bf16.msra.mxu0 %v693
    %713 = vmatpush.bf16.msra.mxu0 %v692
    %714 = vmatpush.bf16.msra.mxu0 %v691
    %715 = vmatmul.bf16.gmra.mxu0 %v655
    %v716 = vpop.f32.mrf.mxu0
    %v717 = vadd.f32 %v645, %v716
    %v718 = vpop.f32.mrf.mxu0
    %v719 = vadd.f32 %v645, %v718
    %720 = vmatmul.bf16.gmra.mxu0 %v656
    %v721 = vpop.f32.mrf.mxu0
    %v722 = vadd.f32 %v645, %v721
    %v723 = vpop.f32.mrf.mxu0
    %v724 = vadd.f32 %v645, %v723
    %725 = vdwg.mxu0
    %v726 = vpack.c.bf16 %v717, %v717
    %v727 = vpack.c.bf16 %v719, %v719
    %v728 = vpack.c.bf16 %v722, %v722
    %v729 = vpack.c.bf16 %v724, %v724
    %730 = vst [vmem:[#allocation12] sm:$0xf] %v726
    %731 = vst [vmem:[#allocation12 + $0x4] sm:$0xf] %v727
    %732 = vst [vmem:[#allocation12 + $0x8] sm:$0xf] %v728
    %733 = vst [vmem:[#allocation12 + $0xc] sm:$0xf] %v729
    %734 = vmax.xlane.f32.xlu0 %v717
    %v735 = vpop.xlane.xlu0 %734
    %736 = vmax.xlane.f32.xlu0 %v719
    %v737 = vpop.xlane.xlu0 %736
    %738 = vmax.xlane.f32.xlu0 %v722
    %v739 = vpop.xlane.xlu0 %738
    %740 = vmax.xlane.f32.xlu0 %v724
    %v741 = vpop.xlane.xlu0 %740
    %v742 = vsub.f32 %v717, %v735
    %v743 = vsub.f32 %v719, %v737
    %v744 = vsub.f32 %v722, %v739
    %v745 = vsub.f32 %v724, %v741
    %v746 = vmul.f32 %v742, 1.442695
    %v747 = vpow.pop %v746
    %v748 = vmul.f32 %v743, 1.442695
    %v749 = vpow.pop %v748
    %v750 = vmul.f32 %v744, 1.442695
    %v751 = vpow.pop %v750
    %v752 = vmul.f32 %v745, 1.442695
    %v753 = vpow.pop %v752
    %754 = vadd.xlane.f32.xlu0 %v747
    %v755 = vpop.xlane.xlu0 %754
    %756 = vadd.xlane.f32.xlu0 %v749
    %v757 = vpop.xlane.xlu0 %756
    %758 = vadd.xlane.f32.xlu0 %v751
    %v759 = vpop.xlane.xlu0 %758
    %760 = vadd.xlane.f32.xlu0 %v753
    %v761 = vpop.xlane.xlu0 %760
    %v762 = vlog2.pop %v755
    %v763 = vmul.f32 %v762, 0.6931472
    %v764 = vlog2.pop %v757
    %v765 = vmul.f32 %v764, 0.6931472
    %v766 = vlog2.pop %v759
    %v767 = vmul.f32 %v766, 0.6931472
    %v768 = vlog2.pop %v761
    %v769 = vmul.f32 %v768, 0.6931472
    %v770 = vadd.f32 %v735, %v763
    %v771 = vadd.f32 %v737, %v765
    %v772 = vadd.f32 %v739, %v767
    %v773 = vadd.f32 %v741, %v769
    %v774 = vld [vmem:[%s9] sm:$0xf]
    %v775 = vld [vmem:[%s9 + $0x4] sm:$0xf]
    %v776 = vld [vmem:[%s9 + $0x8] sm:$0xf]
    %v777 = vld [vmem:[%s9 + $0xc] sm:$0xf]
    %v778 = vunpack.c.l.bf16 %v774
    %v779 = vunpack.c.l.bf16 %v775
    %v780 = vunpack.c.l.bf16 %v776
    %v781 = vunpack.c.l.bf16 %v777
    %v782 = vmul.f32 %v717, %v778
    %v783 = vmul.f32 %v719, %v779
    %v784 = vmul.f32 %v722, %v780
    %v785 = vmul.f32 %v724, %v781
    %786 = vadd.xlane.f32.xlu0 %v782
    %v787 = vpop.xlane.xlu0 %786
    %788 = vadd.xlane.f32.xlu0 %v783
    %v789 = vpop.xlane.xlu0 %788
    %790 = vadd.xlane.f32.xlu0 %v784
    %v791 = vpop.xlane.xlu0 %790
    %792 = vadd.xlane.f32.xlu0 %v785
    %v793 = vpop.xlane.xlu0 %792
    %794 = vadd.xlane.f32.xlu0 %v778
    %v795 = vpop.xlane.xlu0 %794
    %796 = vadd.xlane.f32.xlu0 %v779
    %v797 = vpop.xlane.xlu0 %796
    %798 = vadd.xlane.f32.xlu0 %v780
    %v799 = vpop.xlane.xlu0 %798
    %800 = vadd.xlane.f32.xlu0 %v781
    %v801 = vpop.xlane.xlu0 %800
    %v802 = vsub.f32 %v770, %v787
    %v803 = vsub.f32 %v771, %v789
    %v804 = vsub.f32 %v772, %v791
    %v805 = vsub.f32 %v773, %v793
    %v806 = vmul.f32 %v795, %v802
    %v807 = vmul.f32 %v797, %v803
    %v808 = vmul.f32 %v799, %v804
    %v809 = vmul.f32 %v801, %v805
    %vm810 = vcmask 7168
    %v811 = vsel %vm810, %v806, 0.0
    %v812 = vsel %vm810, %v807, 0.0
    %v813 = vadd.f32 %v811, %v812
    %v814 = vsel %vm810, %v808, 0.0
    %v815 = vadd.f32 %v813, %v814
    %v816 = vsel %vm810, %v809, 0.0
    %v817 = vadd.f32 %v815, %v816
    %818 = vadd.xlane.f32.xlu0 %v817
    %v819 = vpop.xlane.xlu0 %818
    %v820 = vrot.slane %v819, 4
    %v821 = vadd.f32 %v819, %v820
    %v822 = vrot.slane %v821, 2
    %v823 = vadd.f32 %v821, %v822
    %v824 = vrot.slane %v823, 1
    %v825 = vadd.f32 %v823, %v824
    %s826 = vtos %v825
    %s827 = scalar_lea.smem [#allocation14], 0
    %828 = sst [smem:[%s827]] %s826
    // Predicated region
    $region58: #{tpu_custom_call.1} parent=1 // pred_check
      _
    $region59: #{tpu_custom_call.1} parent=1 // pred_check_branch
      %830 = sbr.rel (0) target = $region61
    $region60: #{tpu_custom_call.1} parent=1 // pred_region
      %832 = vsyncadd [#allocation4], 0
      %s833 = sshll.u32 [#allocation11], 4
      %s834 = int_to_ptr.vmem [resolvable:$true] %s833
      %s835 = sshll.u32 %s10, 4
      %s836 = int_to_ptr.hbm [resolvable:$true] %s835
      %841 = dma.vmem_to_hbm [thread:$0]  %s834, 256, %s836, [#allocation4], 64, 64, 4
    $region61: #{tpu_custom_call.1} parent=1 // pred_fallthru
      _
    // Predicated region
    $region62: #{tpu_custom_call.1} parent=1 // pred_check
      _
    $region63: #{tpu_custom_call.1} parent=1 // pred_check_branch
      %843 = sbr.rel (0) target = $region65
    $region64: #{tpu_custom_call.1} parent=1 // pred_region
      %845 = vsyncadd [#allocation13], 0
      %s846 = sshll.u32 [#allocation12], 4
      %s847 = int_to_ptr.vmem [resolvable:$true] %s846
      %s848 = sshll.u32 %s11, 4
      %s849 = int_to_ptr.hbm [resolvable:$true] %s848
      %854 = dma.vmem_to_hbm [thread:$0]  %s847, 256, %s849, [#allocation13], 64, 64, 4
    $region65: #{tpu_custom_call.1} parent=1 // pred_fallthru
      _
    // Predicated region
    $region66: #{tpu_custom_call.1} parent=1 // pred_check
      _
    $region67: #{tpu_custom_call.1} parent=1 // pred_check_branch
      %856 = sbr.rel (0) target = $region69
    $region68: #{tpu_custom_call.1} parent=1 // pred_region
      %858 = vsyncadd [#allocation5], 0
      %s860 = sshll.u32 %s12, 4
      %s861 = int_to_ptr.hbm [resolvable:$true] %s860
      %863 = dma.smem_to_hbm [#allocation14], 16, %s861, [#allocation5]
    $region69: #{tpu_custom_call.1} parent=1 // pred_fallthru
      _
    // Predicated region
    $region70: #{tpu_custom_call.1} parent=1 // pred_check
      _
    $region71: #{tpu_custom_call.1} parent=1 // pred_check_branch
      %865 = sbr.rel (0) target = $region73
    $region72: #{tpu_custom_call.1} parent=1 // pred_region
      %867 = dma.done [#allocation4], 256
    $region73: #{tpu_custom_call.1} parent=1 // pred_fallthru
      _
    // Predicated region
    $region74: #{tpu_custom_call.1} parent=1 // pred_check
      _
    $region75: #{tpu_custom_call.1} parent=1 // pred_check_branch
      %869 = sbr.rel (0) target = $region77
    $region76: #{tpu_custom_call.1} parent=1 // pred_region
      %871 = dma.done [#allocation13], 256
    $region77: #{tpu_custom_call.1} parent=1 // pred_fallthru
      _
    // Predicated region
    $region78: #{tpu_custom_call.1} parent=1 // pred_check
      _
    $region79: #{tpu_custom_call.1} parent=1 // pred_check_branch
      %873 = sbr.rel (0) target = $region81
    $region80: #{tpu_custom_call.1} parent=1 // pred_region
      %875 = dma.done [#allocation5], 16
    $region81: #{tpu_custom_call.1} parent=1 // pred_fallthru
      _
    %876 = sfence
    %877 = vsyncpa [#allocation3], 1
    %878 = vsyncpa [#allocation7], 1
    %879 = vsyncpa [#allocation10], 1
    %880 = vsyncpa [#allocation4], 1
    %881 = vsyncpa [#allocation13], 1
    %882 = vsyncpa [#allocation5], 1

</llo_original>
